<compile_context>
chip_gen: v7x
topology: tpu7x:2x2x1
jax: 0.10.0
libtpu: 0.0.40
codegen_flags: <defaults>
</compile_context>

<pallas_src>
import functools

import jax
import jax.numpy as jnp
from jax.experimental import pallas as pl
from jax.experimental.pallas import tpu as pltpu


def _dice_sums_kernel(pred_ref, target_ref, inter_ref, union_ref, *,
                      s_total, s_tile, tiles_per_shard, needs_mask):
    """Accumulate per-sample intersection / union over spatial tiles."""
    j = pl.program_id(2)  # spatial reduction axis — last grid axis

    @pl.when(j == 0)
    def _init():
        inter_ref[...] = jnp.zeros_like(inter_ref)
        union_ref[...] = jnp.zeros_like(union_ref)

    x = pred_ref[...].astype(jnp.float32)
    t = target_ref[...].astype(jnp.float32)
    # sigmoid(x) == 0.5 * tanh(0.5 * x) + 0.5  -> single EUP push per vreg.
    p = 0.5 * jnp.tanh(0.5 * x) + 0.5

    inter = p * t
    union = p + t  # sum(p) + sum(t) fused into one cross-lane reduction

    if needs_mask:
        shard = pl.program_id(1)
        start = (shard * tiles_per_shard + j) * s_tile
        lane = jax.lax.broadcasted_iota(jnp.int32, inter.shape, 1)
        valid = (lane + start) < s_total
        inter = jnp.where(valid, inter, 0.0)
        union = jnp.where(valid, union, 0.0)

    b = inter.shape[0]
    inter_ref[...] += jnp.sum(inter, axis=-1).reshape(1, b, 1)
    union_ref[...] += jnp.sum(union, axis=-1).reshape(1, b, 1)


def _pick_block_bytes():
    """Per-input-buffer block budget, generation-aware (v7x has half the VMEM)."""
    vmem = None
    try:
        info = pltpu.get_tpu_info()
        vmem = getattr(info, "vmem_capacity_bytes", None)
    except Exception:
        vmem = None
    if vmem is not None and vmem >= 100 * 1024 * 1024:
        return 8 * 1024 * 1024   # v5e / v6e: 128 MiB physical VMEM
    return 4 * 1024 * 1024       # v7x (64 MiB VMEM) or unknown


def dice_loss(pred, target, smooth=1e-5, *, max_block_bytes=None):
    """1 - mean_n[(2*sum(sig(pred)*tgt) + s) / (sum(sig(pred)) + sum(tgt) + s)]."""
    n = pred.shape[0]
    s = 1
    for d in pred.shape[1:]:
        s *= d

    pred_flat = pred.reshape(n, s)
    target_flat = target.reshape(n, s)

    if max_block_bytes is None:
        max_block_bytes = _pick_block_bytes()

    # --- tile selection ------------------------------------------------------
    # Dtype-aware sublane packing: 8 rows for f32, 16 for bf16, 32 for int8.
    min_itemsize = min(pred_flat.dtype.itemsize, target_flat.dtype.itemsize, 4)
    packing = max(1, 4 // max(1, min_itemsize))
    b_tile = min(n, 8 * packing)

    elem_bytes = max(pred_flat.dtype.itemsize, target_flat.dtype.itemsize)
    max_elems = max(128, max_block_bytes // (elem_bytes * b_tile))
    if s <= max_elems:
        s_tile = s                                   # full spatial dim: legal block
    else:
        s_tile = max(128, (max_elems // 128) * 128)  # lane-aligned

    tiles_total = pl.cdiv(s, s_tile)
    num_batch_blocks = pl.cdiv(n, b_tile)
    # Guarantee >= 2 parallel blocks so a megacore (v7x) shards the HBM stream.
    n_shards = 2 if (num_batch_blocks == 1 and tiles_total >= 2) else 1
    tiles_per_shard = pl.cdiv(tiles_total, n_shards)
    needs_mask = (n_shards * tiles_per_shard * s_tile) != s

    grid = (num_batch_blocks, n_shards, tiles_per_shard)

    if n_shards * tiles_per_shard == tiles_total:
        in_map = lambda i, shard, j: (i, shard * tiles_per_shard + j)
    else:
        # Clamp the (masked-to-zero) overshoot tile onto the last valid block:
        # same block index as the previous step -> the pipeline skips the DMA.
        in_map = lambda i, shard, j: (
            i, jnp.minimum(shard * tiles_per_shard + j, tiles_total - 1))

    out_map = lambda i, shard, j: (shard, i, 0)   # resident across j (reduction)

    in_block_bytes = b_tile * s_tile * (pred_flat.dtype.itemsize +
                                        target_flat.dtype.itemsize)
    vmem_limit = int(min(max(2 * in_block_bytes + (8 << 20), 16 << 20), 96 << 20))

    kernel = functools.partial(
        _dice_sums_kernel,
        s_total=s, s_tile=s_tile, tiles_per_shard=tiles_per_shard,
        needs_mask=needs_mask)

    inter, union = pl.pallas_call(
        kernel,
        out_shape=(
            jax.ShapeDtypeStruct((n_shards, n, 1), jnp.float32),
            jax.ShapeDtypeStruct((n_shards, n, 1), jnp.float32),
        ),
        grid_spec=pltpu.PrefetchScalarGridSpec(
            num_scalar_prefetch=0,
            grid=grid,
            in_specs=[
                pl.BlockSpec((b_tile, s_tile), in_map),
                pl.BlockSpec((b_tile, s_tile), in_map),
            ],
            out_specs=[
                pl.BlockSpec((1, b_tile, 1), out_map),
                pl.BlockSpec((1, b_tile, 1), out_map),
            ],
        ),
        compiler_params=pltpu.CompilerParams(
            dimension_semantics=("parallel", "parallel", "arbitrary"),
            vmem_limit_bytes=vmem_limit,
        ),
    )(pred_flat, target_flat)

    # Tiny epilogue in plain JAX: combine shards, dice ratio, mean.
    inter = jnp.sum(inter[:, :, 0], axis=0)   # (n,)
    union = jnp.sum(union[:, :, 0], axis=0)   # (n,)
    smooth = jnp.float32(smooth)
    dice = (2.0 * inter + smooth) / (union + smooth)
    return 1.0 - jnp.mean(dice)


def _dice_loss_ref(pred, target, smooth=1e-5):
    probs = jax.nn.sigmoid(pred.astype(jnp.float32))
    target = target.astype(jnp.float32)
    intersection = jnp.sum(probs * target, axis=(1, 2))
    union = jnp.sum(probs, axis=(1, 2)) + jnp.sum(target, axis=(1, 2))
    dice = (2.0 * intersection + smooth) / (union + smooth)
    return 1.0 - jnp.mean(dice)


if __name__ == "__main__":
    key = jax.random.PRNGKey(0)
    k1, k2, k3, k4, k5, k6 = jax.random.split(key, 6)

    # (batch, H, W) — the PyTorch module reduces over dims (1, 2).
    pred = jax.random.normal(k1, (2, 16, 16), dtype=jnp.float32)
    target = (jax.random.uniform(k2, (2, 16, 16)) > 0.5).astype(jnp.float32)
    loss = jax.block_until_ready(dice_loss(pred, target))
    ref = _dice_loss_ref(pred, target)
    assert abs(float(loss) - float(ref)) < 1e-5, (float(loss), float(ref))

    # Multi-tile spatial path + 2-way parallel shard axis + in-kernel ragged
    # mask + clamped overshoot tile (tiles_total=3, shards=2).
    pred2 = jax.random.normal(k3, (2, 20, 16), dtype=jnp.float32)
    target2 = (jax.random.uniform(k4, (2, 20, 16)) > 0.5).astype(jnp.float32)
    loss2 = jax.block_until_ready(dice_loss(pred2, target2, max_block_bytes=1024))
    ref2 = _dice_loss_ref(pred2, target2)
    assert abs(float(loss2) - float(ref2)) < 1e-5, (float(loss2), float(ref2))

    # Partial last batch block (n % b_tile != 0) + multi-tile + ragged mask.
    pred3 = jax.random.normal(k5, (10, 20, 20), dtype=jnp.float32)
    target3 = (jax.random.uniform(k6, (10, 20, 20)) > 0.5).astype(jnp.float32)
    loss3 = jax.block_until_ready(dice_loss(pred3, target3, max_block_bytes=4096))
    ref3 = _dice_loss_ref(pred3, target3)
    assert abs(float(loss3) - float(ref3)) < 1e-5, (float(loss3), float(ref3))

    # bf16 inputs: half the HBM traffic; packing-aware b_tile, f32 math in-kernel.
    pred4 = jax.random.normal(k1, (4, 24, 24), dtype=jnp.bfloat16)
    target4 = (jax.random.uniform(k2, (4, 24, 24)) > 0.5).astype(jnp.bfloat16)
    loss4 = jax.block_until_ready(dice_loss(pred4, target4))
    ref4 = _dice_loss_ref(pred4, target4)
    assert abs(float(loss4) - float(ref4)) < 1e-3, (float(loss4), float(ref4))

    print("KERNEL_OK")
</pallas_src>

<mosaic_0001>
module attributes {stable_mosaic.version = 11 : i64} {
  func.func @_dice_sums_kernel(%arg0: i32, %arg1: i32, %arg2: i32, %arg3: memref<2x256xf32, #tpu.memory_space<vmem>>, %arg4: memref<2x256xf32, #tpu.memory_space<vmem>>, %arg5: memref<1x2x1xf32, #tpu.memory_space<vmem>>, %arg6: memref<1x2x1xf32, #tpu.memory_space<vmem>>) attributes {dimension_semantics = [#tpu.dimension_semantics<parallel>, #tpu.dimension_semantics<parallel>, #tpu.dimension_semantics<arbitrary>], iteration_bounds = array<i64: 1, 1, 1>, scalar_prefetch = 0 : i64, scratch_operands = 0 : i64, tpu.core_type = #tpu.core_type<tc>, window_params = [{transform_indices = @transform_0, window_bounds = array<i64: 2, 256>}, {transform_indices = @transform_1, window_bounds = array<i64: 2, 256>}, {transform_indices = @transform_2, window_bounds = array<i64: 1, 2, 1>}, {transform_indices = @transform_3, window_bounds = array<i64: 1, 2, 1>}]} {
    %c0_i32 = arith.constant 0 : i32
    %0 = arith.cmpi eq, %arg2, %c0_i32 : i32
    %1 = arith.extui %0 : i1 to i32
    %c0_i32_0 = arith.constant 0 : i32
    %2 = arith.cmpi ne, %1, %c0_i32_0 : i32
    scf.if %2 {
      %cst_20 = arith.constant 0.000000e+00 : f32
      %24 = vector.broadcast %cst_20 : f32 to vector<1x2x1xf32>
      %c0_21 = arith.constant 0 : index
      %c0_22 = arith.constant 0 : index
      %c0_23 = arith.constant 0 : index
      %25 = vector.load %arg5[%c0_21, %c0_22, %c0_23] : memref<1x2x1xf32, #tpu.memory_space<vmem>>, vector<1x2x1xf32>
      tpu.vector_store %arg5[%c0_21, %c0_22, %c0_23], %24 {strides = array<i32>} : memref<1x2x1xf32, #tpu.memory_space<vmem>>, vector<1x2x1xf32>,
      %cst_24 = arith.constant 0.000000e+00 : f32
      %26 = vector.broadcast %cst_24 : f32 to vector<1x2x1xf32>
      %c0_25 = arith.constant 0 : index
      %c0_26 = arith.constant 0 : index
      %c0_27 = arith.constant 0 : index
      %27 = vector.load %arg6[%c0_25, %c0_26, %c0_27] : memref<1x2x1xf32, #tpu.memory_space<vmem>>, vector<1x2x1xf32>
      tpu.vector_store %arg6[%c0_25, %c0_26, %c0_27], %26 {strides = array<i32>} : memref<1x2x1xf32, #tpu.memory_space<vmem>>, vector<1x2x1xf32>,
    } else {
    }
    %c0 = arith.constant 0 : index
    %c0_1 = arith.constant 0 : index
    %3 = vector.load %arg3[%c0, %c0_1] : memref<2x256xf32, #tpu.memory_space<vmem>>, vector<2x256xf32>
    %c0_2 = arith.constant 0 : index
    %c0_3 = arith.constant 0 : index
    %4 = vector.load %arg4[%c0_2, %c0_3] : memref<2x256xf32, #tpu.memory_space<vmem>>, vector<2x256xf32>
    %cst = arith.constant 5.000000e-01 : f32
    %5 = vector.broadcast %cst : f32 to vector<2x256xf32>
    %6 = arith.mulf %5, %3 : vector<2x256xf32>
    %7 = math.tanh %6 : vector<2x256xf32>
    %cst_4 = arith.constant 5.000000e-01 : f32
    %8 = vector.broadcast %cst_4 : f32 to vector<2x256xf32>
    %9 = arith.mulf %8, %7 : vector<2x256xf32>
    %cst_5 = arith.constant 5.000000e-01 : f32
    %10 = vector.broadcast %cst_5 : f32 to vector<2x256xf32>
    %11 = arith.addf %9, %10 : vector<2x256xf32>
    %12 = arith.mulf %11, %4 : vector<2x256xf32>
    %13 = arith.addf %11, %4 : vector<2x256xf32>
    %c0_6 = arith.constant 0 : index
    %c0_7 = arith.constant 0 : index
    %c0_8 = arith.constant 0 : index
    %14 = vector.load %arg5[%c0_6, %c0_7, %c0_8] : memref<1x2x1xf32, #tpu.memory_space<vmem>>, vector<1x2x1xf32>
    %cst_9 = arith.constant dense<0.000000e+00> : vector<2xf32>
    %15 = vector.multi_reduction <add>, %12, %cst_9 [1] : vector<2x256xf32> to vector<2xf32>
    %16 = vector.shape_cast %15 : vector<2xf32> to vector<1x2x1xf32>
    %17 = arith.addf %14, %16 : vector<1x2x1xf32>
    %c0_10 = arith.constant 0 : index
    %c0_11 = arith.constant 0 : index
    %c0_12 = arith.constant 0 : index
    %18 = vector.load %arg5[%c0_10, %c0_11, %c0_12] : memref<1x2x1xf32, #tpu.memory_space<vmem>>, vector<1x2x1xf32>
    tpu.vector_store %arg5[%c0_10, %c0_11, %c0_12], %17 {strides = array<i32>} : memref<1x2x1xf32, #tpu.memory_space<vmem>>, vector<1x2x1xf32>,
    %c0_13 = arith.constant 0 : index
    %c0_14 = arith.constant 0 : index
    %c0_15 = arith.constant 0 : index
    %19 = vector.load %arg6[%c0_13, %c0_14, %c0_15] : memref<1x2x1xf32, #tpu.memory_space<vmem>>, vector<1x2x1xf32>
    %cst_16 = arith.constant dense<0.000000e+00> : vector<2xf32>
    %20 = vector.multi_reduction <add>, %13, %cst_16 [1] : vector<2x256xf32> to vector<2xf32>
    %21 = vector.shape_cast %20 : vector<2xf32> to vector<1x2x1xf32>
    %22 = arith.addf %19, %21 : vector<1x2x1xf32>
    %c0_17 = arith.constant 0 : index
    %c0_18 = arith.constant 0 : index
    %c0_19 = arith.constant 0 : index
    %23 = vector.load %arg6[%c0_17, %c0_18, %c0_19] : memref<1x2x1xf32, #tpu.memory_space<vmem>>, vector<1x2x1xf32>
    tpu.vector_store %arg6[%c0_17, %c0_18, %c0_19], %22 {strides = array<i32>} : memref<1x2x1xf32, #tpu.memory_space<vmem>>, vector<1x2x1xf32>,
    return
  }
  func.func @transform_0(%arg0: i32, %arg1: i32, %arg2: i32) -> (i32, i32) {
    %c1_i32 = arith.constant 1 : i32
    %0 = arith.muli %arg1, %c1_i32 : i32
    %1 = arith.addi %0, %arg2 : i32
    %c0_i32 = arith.constant 0 : i32
    return %arg0, %1 : i32, i32
  }
  func.func @transform_1(%arg0: i32, %arg1: i32, %arg2: i32) -> (i32, i32) {
    %c1_i32 = arith.constant 1 : i32
    %0 = arith.muli %arg1, %c1_i32 : i32
    %1 = arith.addi %0, %arg2 : i32
    %c0_i32 = arith.constant 0 : i32
    return %arg0, %1 : i32, i32
  }
  func.func @transform_2(%arg0: i32, %arg1: i32, %arg2: i32) -> (i32, i32, i32) {
    %c0_i32 = arith.constant 0 : i32
    %c0_i32_0 = arith.constant 0 : i32
    return %arg1, %arg0, %c0_i32 : i32, i32, i32
  }
  func.func @transform_3(%arg0: i32, %arg1: i32, %arg2: i32) -> (i32, i32, i32) {
    %c0_i32 = arith.constant 0 : i32
    %c0_i32_0 = arith.constant 0 : i32
    return %arg1, %arg0, %c0_i32 : i32, i32, i32
  }
}

</mosaic_0001>

<llo_original>
// kernel: tpu_custom_call.1
$region0: #{tpu_custom_call.1}
  #allocation0 [shape = 'u32[]', space=smem, size = 0x4, offset = 0x4, fixed_abs, tag = 'smem constant byte address 0x4 - core index']
  #allocation1 [shape = 'u32[144,128]{1,0:T(1,128)}', space=vmem, size = 0x12000, scoped, tag = 'internal scratch']
  %s0 = inlined_call_operand.hbm [shape: f32[2,256], index: 0, kind: input, shape index: {}]
  %s1 = inlined_call_operand.hbm [shape: f32[2,256], index: 1, kind: input, shape index: {}]
  %s2 = inlined_call_operand.vmem [shape: f32[1,2,1], index: 2, kind: output, shape index: {0}]
  %s3 = inlined_call_operand.vmem [shape: f32[1,2,1], index: 3, kind: output, shape index: {1}]
  %4 = xla_tuple %s2, %s3
  %s5 = sld [smem:[#allocation0]]
  $region38: #{tpu_custom_call.1} parent=0
    _
  %s7 = ssub.s32 1, %s5
  %s8 = scalar_select 0, %s7, %s5
  $region1: #{tpu_custom_call.1} parent=0
    #allocation2 [shape = 'u8[2048]{0}', space=vmem, size = 0x800, scoped, tag = 'input window, operand 0, single buffered']
    #allocation3 [shape = 's32[1]{0}', space=sflag, size = 0x4, scoped, tag = 'scoped memory for tpu_custom_call.1']
    #allocation4 [shape = 'u8[2048]{0}', space=vmem, size = 0x800, scoped, tag = 'input window, operand 1, single buffered']
    #allocation5 [shape = 's32[1]{0}', space=sflag, size = 0x4, scoped, tag = 'scoped memory for tpu_custom_call.1']
    %9 = vsyncpa [#allocation3], 0
    %10 = vsyncpa [#allocation5], 0
    // Predicated region
    $region2: #{tpu_custom_call.1} parent=1 // pred_check
      _
    $region3: #{tpu_custom_call.1} parent=1 // pred_check_branch
      %12 = sbr.rel (0) target = $region5
    $region4: #{tpu_custom_call.1} parent=1 // pred_region
      %s13 = sadd.s32 0, 0
      %s14 = smul.u32 2, %s13
      %s16 = ssub.s32 64, 64
      %17 = vsyncadd [#allocation3], %s16
      %s18 = smul.addr %s14, 32
      %s19 = scalar_lea.hbm %s0, %s18
      %s21 = sshll.u32 [#allocation2], 4
      %s22 = int_to_ptr.vmem [resolvable:$true] %s21
      %24 = dma.hbm_to_vmem [thread:$0]  %s19, 64, %s22, [#allocation3]
    $region5: #{tpu_custom_call.1} parent=1 // pred_fallthru
      _
    // Predicated region
    $region6: #{tpu_custom_call.1} parent=1 // pred_check
      _
    $region7: #{tpu_custom_call.1} parent=1 // pred_check_branch
      %26 = sbr.rel (0) target = $region9
    $region8: #{tpu_custom_call.1} parent=1 // pred_region
      %s27 = sadd.s32 0, 0
      %s28 = smul.u32 2, %s27
      %s30 = ssub.s32 64, 64
      %31 = vsyncadd [#allocation5], %s30
      %s32 = smul.addr %s28, 32
      %s33 = scalar_lea.hbm %s1, %s32
      %s35 = sshll.u32 [#allocation4], 4
      %s36 = int_to_ptr.vmem [resolvable:$true] %s35
      %38 = dma.hbm_to_vmem [thread:$0]  %s33, 64, %s36, [#allocation5]
    $region9: #{tpu_custom_call.1} parent=1 // pred_fallthru
      _
    // Predicated region
    $region10: #{tpu_custom_call.1} parent=1 // pred_check
      _
    $region11: #{tpu_custom_call.1} parent=1 // pred_check_branch
      %40 = sbr.rel (0) target = $region13
    $region12: #{tpu_custom_call.1} parent=1 // pred_region
      %41 = dma.done [#allocation3], 64
    $region13: #{tpu_custom_call.1} parent=1 // pred_fallthru
      _
    // Predicated region
    $region14: #{tpu_custom_call.1} parent=1 // pred_check
      _
    $region15: #{tpu_custom_call.1} parent=1 // pred_check_branch
      %43 = sbr.rel (0) target = $region17
    $region16: #{tpu_custom_call.1} parent=1 // pred_region
      %44 = dma.done [#allocation5], 64
    $region17: #{tpu_custom_call.1} parent=1 // pred_fallthru
      _
    %s45 = sadd.s32 0, 0
    %s46 = smul.u32 2, %s45
    %s47 = sadd.s32 0, 0
    %s48 = smul.u32 2, %s47
    %p49 = scmp.eq.s32.totalorder 0, 0
    // Predicated region
    $region18: #{tpu_custom_call.1} parent=1 // pred_check
      %p50 = pneg %p49
    $region19: #{tpu_custom_call.1} parent=1 // pred_check_branch
      %52 = sbr.rel (%p50) target = $region21
    $region20: #{tpu_custom_call.1} parent=1 // pred_region
      %vm53 = vcmask 1024
      %54 = vst.msk [vmem:[%s2] sm:$0x3] %vm53, 0.0
      %55 = vst.msk [vmem:[%s3] sm:$0x3] %vm53, 0.0
    $region21: #{tpu_custom_call.1} parent=1 // pred_fallthru
      _
    %v56 = vld [vmem:[#allocation2] sm:$0xf]
    %v57 = vld [vmem:[#allocation4] sm:$0xf]
    %v58 = vmul.f32 %v56, 0.5
    %v59 = vtanh.pop %v58
    %v60 = vmul.f32 %v59, 0.5
    %v61 = vadd.f32 %v60, 0.5
    %v62 = vmul.f32 %v61, %v57
    %v63 = vadd.f32 %v61, %v57
    %v64 = vld [vmem:[%s2] sm:$0x3]
    %v67 = vunpack.c.l.s4 1983009808
    %v68 = vunpack.c.0.s8 %v67
    %v69 = vlaneseq
    %v70 = vshrl.u32 %v69, 7
    %v71 = vsub.s32 %v68, %v70
    %v72 = vrot.slane %v62, %v71
    %v73 = vcombine.high %v72, %v72
    %vm76 = vcmask 1041408
    %v77 = vsel %vm76, %v72, 0.0
    %v78 = vsel %vm76, %v73, 0.0
    %v79 = vadd.f32 %v77, %v78
    %80 = vadd.xlane.f32.xlu0 %v79
    %v81 = vpop.xlane.xlu0 %80
    %v82 = vadd.f32 %v64, %v81
    %vm83 = vcmask 1024
    %84 = vst.msk [vmem:[%s2] sm:$0x3] %vm83, %v82
    %v85 = vld [vmem:[%s3] sm:$0x3]
    %v88 = vunpack.c.l.s4 1983009808
    %v89 = vunpack.c.0.s8 %v88
    %v90 = vlaneseq
    %v91 = vshrl.u32 %v90, 7
    %v92 = vsub.s32 %v89, %v91
    %v93 = vrot.slane %v63, %v92
    %v94 = vcombine.high %v93, %v93
    %v97 = vsel %vm76, %v93, 0.0
    %v98 = vsel %vm76, %v94, 0.0
    %v99 = vadd.f32 %v97, %v98
    %100 = vadd.xlane.f32.xlu0 %v99
    %v101 = vpop.xlane.xlu0 %100
    %v102 = vadd.f32 %v85, %v101
    %103 = vst.msk [vmem:[%s3] sm:$0x3] %vm83, %v102
    // Predicated region
    $region22: #{tpu_custom_call.1} parent=1 // pred_check
      _
    $region23: #{tpu_custom_call.1} parent=1 // pred_check_branch
      %105 = sbr.rel (0) target = $region25
    $region24: #{tpu_custom_call.1} parent=1 // pred_region
      _
    $region25: #{tpu_custom_call.1} parent=1 // pred_fallthru
      _
    // Predicated region
    $region26: #{tpu_custom_call.1} parent=1 // pred_check
      _
    $region27: #{tpu_custom_call.1} parent=1 // pred_check_branch
      %107 = sbr.rel (0) target = $region29
    $region28: #{tpu_custom_call.1} parent=1 // pred_region
      _
    $region29: #{tpu_custom_call.1} parent=1 // pred_fallthru
      _
    // Predicated region
    $region30: #{tpu_custom_call.1} parent=1 // pred_check
      _
    $region31: #{tpu_custom_call.1} parent=1 // pred_check_branch
      %109 = sbr.rel (0) target = $region33
    $region32: #{tpu_custom_call.1} parent=1 // pred_region
      _
    $region33: #{tpu_custom_call.1} parent=1 // pred_fallthru
      _
    // Predicated region
    $region34: #{tpu_custom_call.1} parent=1 // pred_check
      _
    $region35: #{tpu_custom_call.1} parent=1 // pred_check_branch
      %111 = sbr.rel (0) target = $region37
    $region36: #{tpu_custom_call.1} parent=1 // pred_region
      _
    $region37: #{tpu_custom_call.1} parent=1 // pred_fallthru
      _
    %112 = vsyncpa [#allocation3], 1
    %113 = vsyncpa [#allocation5], 1

</llo_original>
